<compile_context>
chip_gen: v7x
topology: tpu7x:2x2x1
jax: 0.10.0
libtpu: 0.0.40
codegen_flags: <defaults>
</compile_context>

<pallas_src>
import jax
import jax.numpy as jnp
from jax.experimental import pallas as pl
from jax.experimental.pallas import tpu as pltpu


def _identity_copy_kernel(x_ref, o_ref):
    # Identity: load the tile from VMEM and store it back (lane-dense full-width stores).
    o_ref[...] = x_ref[...]


# Below this size a metadata reshape is strictly faster than any kernel launch.
_MIN_PALLAS_BYTES = 1 << 20  # 1 MiB


def squeeze(x: jax.Array, *, tile_rows: int | None = None, force_pallas: bool = False) -> jax.Array:
    """Pallas equivalent of torch.squeeze(x): drops every size-1 dimension."""
    out_shape = tuple(int(d) for d in x.shape if d != 1)
    n = int(x.size)
    itemsize = jnp.dtype(x.dtype).itemsize

    # ---- fast path: pure metadata, zero HBM traffic ------------------------
    # Used for empty/0-D/1-element tensors, non-128-divisible sizes, and small
    # tensors where per-step + launch overhead dwarfs the copy.
    if n == 0 or n % 128 != 0:
        return jnp.reshape(x, out_shape)
    if not force_pallas and n * itemsize < _MIN_PALLAS_BYTES:
        return jnp.reshape(x, out_shape)

    # ---- lane-dense 2-D layout ---------------------------------------------
    # Pick the largest lane width (multiple of 128) that divides the element
    # count so every vector store is unmasked and DMA bursts are dense.
    lanes = next(l for l in (4096, 2048, 1024, 512, 256, 128) if n % l == 0)
    rows = n // lanes
    x2d = x.reshape(rows, lanes)  # contiguous reshape: free metadata

    # ---- tile sizing ---------------------------------------------------------
    # Sublane packing: 8 rows (f32) / 16 (bf16) / 32 (int8) per vreg.
    pack = max(8, 32 // itemsize)
    if tile_rows is None:
        # ~2 MiB per tile: with double-buffered in + out that is ~8 MiB of live
        # VMEM, safely under the scoped defaults on v5e (16 MiB) and v7x (32 MiB),
        # while big enough to amortize the ~0.35 us per-grid-step overhead.
        target_tile_bytes = 2 * 1024 * 1024
        tile_rows = max(pack, (target_tile_bytes // (lanes * itemsize)) // pack * pack)
    else:
        tile_rows = max(pack, (tile_rows // pack) * pack)

    if rows <= tile_rows:
        block_rows = rows  # single full-extent block (allowed even if not 8-aligned)
    else:
        block_rows = tile_rows  # multiple of `pack`, satisfies (8, 128) tiling

    grid = (pl.cdiv(rows, block_rows),)

    y2d = pl.pallas_call(
        _identity_copy_kernel,
        out_shape=jax.ShapeDtypeStruct((rows, lanes), x.dtype),
        grid=grid,
        in_specs=[pl.BlockSpec((block_rows, lanes), lambda i: (i, 0))],
        out_specs=pl.BlockSpec((block_rows, lanes), lambda i: (i, 0)),
        # Identity copy: let the output reuse the input HBM buffer.
        input_output_aliases={0: 0},
        compiler_params=pltpu.CompilerParams(
            # Row axis is embarrassingly parallel -> both TCs on v7x can issue
            # independent DMA streams; harmless on single-TC v5e/v6e.
            dimension_semantics=("parallel",),
        ),
    )(x2d)

    return y2d.reshape(out_shape)


if __name__ == "__main__":
    key = jax.random.PRNGKey(0)

    # 1) NCHW-style input with a size-1 dim: (2, 1, 16, 16) -> (2, 16, 16).
    #    force_pallas=True so the kernel path is exercised even at small size.
    x = jax.random.normal(key, (2, 1, 16, 16), dtype=jnp.float32)
    y = squeeze(x, force_pallas=True)
    jax.block_until_ready(y)
    ref = jnp.squeeze(x)
    assert y.shape == ref.shape, (y.shape, ref.shape)
    assert y.dtype == ref.dtype, (y.dtype, ref.dtype)
    assert bool(jnp.all(y == ref)), "value mismatch (pallas path, single block)"

    # 2) Gridded path (grid > 1) with an explicit small tile override.
    x2 = jax.random.normal(jax.random.PRNGKey(1), (8, 1, 64, 256), dtype=jnp.float32)
    y2 = squeeze(x2, tile_rows=8, force_pallas=True)
    jax.block_until_ready(y2)
    ref2 = jnp.squeeze(x2)
    assert y2.shape == ref2.shape and y2.dtype == ref2.dtype
    assert bool(jnp.all(y2 == ref2)), "value mismatch (pallas path, gridded)"

    # 3) Degenerate / odd shapes take the metadata fast path (no kernel).
    x3 = jax.random.normal(jax.random.PRNGKey(2), (3, 1, 5), dtype=jnp.float32)  # 15 elems
    y3 = squeeze(x3)
    assert y3.shape == jnp.squeeze(x3).shape and bool(jnp.all(y3 == jnp.squeeze(x3)))

    x4 = jnp.ones((1, 1, 1), dtype=jnp.float32)  # squeezes to a 0-D scalar
    y4 = squeeze(x4)
    assert y4.shape == jnp.squeeze(x4).shape and bool(jnp.all(y4 == jnp.squeeze(x4)))

    print("KERNEL_OK")
</pallas_src>

<mosaic_0001>
module attributes {stable_mosaic.version = 11 : i64} {
  func.func @_identity_copy_kernel(%arg0: i32, %arg1: memref<1x512xf32, #tpu.memory_space<vmem>>, %arg2: memref<1x512xf32, #tpu.memory_space<vmem>>) attributes {dimension_semantics = [#tpu.dimension_semantics<parallel>], iteration_bounds = array<i64: 1>, scalar_prefetch = 0 : i64, scratch_operands = 0 : i64, tpu.core_type = #tpu.core_type<tc>, window_params = [{transform_indices = @transform_0, window_bounds = array<i64: 1, 512>}, {transform_indices = @transform_1, window_bounds = array<i64: 1, 512>}]} {
    %c0 = arith.constant 0 : index
    %c0_0 = arith.constant 0 : index
    %0 = vector.load %arg1[%c0, %c0_0] : memref<1x512xf32, #tpu.memory_space<vmem>>, vector<1x512xf32>
    %c0_1 = arith.constant 0 : index
    %c0_2 = arith.constant 0 : index
    %1 = vector.load %arg2[%c0_1, %c0_2] : memref<1x512xf32, #tpu.memory_space<vmem>>, vector<1x512xf32>
    tpu.vector_store %arg2[%c0_1, %c0_2], %0 {strides = array<i32>} : memref<1x512xf32, #tpu.memory_space<vmem>>, vector<1x512xf32>,
    return
  }
  func.func @transform_0(%arg0: i32) -> (i32, i32) {
    %c0_i32 = arith.constant 0 : i32
    %c0_i32_0 = arith.constant 0 : i32
    return %arg0, %c0_i32 : i32, i32
  }
  func.func @transform_1(%arg0: i32) -> (i32, i32) {
    %c0_i32 = arith.constant 0 : i32
    %c0_i32_0 = arith.constant 0 : i32
    return %arg0, %c0_i32 : i32, i32
  }
}

</mosaic_0001>

<llo_original>
// kernel: tpu_custom_call.1
$region0: #{tpu_custom_call.1}
  #allocation0 [shape = 'u32[]', space=smem, size = 0x4, offset = 0x4, fixed_abs, tag = 'smem constant byte address 0x4 - core index']
  #allocation1 [shape = 'u32[144,128]{1,0:T(1,128)}', space=vmem, size = 0x12000, scoped, tag = 'internal scratch']
  %s0 = inlined_call_operand.hbm [shape: f32[1,512], index: 0, kind: input, shape index: {}, may-alias: {0,1}]
  %s1 = inlined_call_operand.hbm [shape: f32[1,512], index: 1, kind: output, shape index: {}, may-alias: {0,1}]
  %s2 = sld [smem:[#allocation0]]
  $region18: #{tpu_custom_call.1} parent=0
    _
  %s4 = ssub.s32 1, %s2
  %s5 = scalar_select 0, %s4, %s2
  $region1: #{tpu_custom_call.1} parent=0
    #allocation2 [shape = 'u8[2048]{0}', space=vmem, size = 0x800, scoped, tag = 'input window, operand 0, single buffered']
    #allocation3 [shape = 's32[1]{0}', space=sflag, size = 0x4, scoped, tag = 'scoped memory for tpu_custom_call.1']
    #allocation4 [shape = 's32[1]{0}', space=sflag, size = 0x4, scoped, tag = 'scoped memory for tpu_custom_call.1']
    #allocation5 [shape = 'u8[2048]{0}', space=vmem, size = 0x800, scoped, tag = 'output window, operand 0, single buffered']
    %6 = vsyncpa [#allocation3], 0
    %7 = vsyncpa [#allocation4], 0
    // Predicated region
    $region2: #{tpu_custom_call.1} parent=1 // pred_check
      _
    $region3: #{tpu_custom_call.1} parent=1 // pred_check_branch
      %9 = sbr.rel (0) target = $region5
    $region4: #{tpu_custom_call.1} parent=1 // pred_region
      %s11 = ssub.s32 64, 64
      %12 = vsyncadd [#allocation3], %s11
      %s14 = sshll.u32 [#allocation2], 4
      %s15 = int_to_ptr.vmem [resolvable:$true] %s14
      %17 = dma.hbm_to_vmem [thread:$0]  %s0, 64, %s15, [#allocation3]
    $region5: #{tpu_custom_call.1} parent=1 // pred_fallthru
      _
    // Predicated region
    $region6: #{tpu_custom_call.1} parent=1 // pred_check
      _
    $region7: #{tpu_custom_call.1} parent=1 // pred_check_branch
      %19 = sbr.rel (0) target = $region9
    $region8: #{tpu_custom_call.1} parent=1 // pred_region
      %20 = dma.done [#allocation3], 64
    $region9: #{tpu_custom_call.1} parent=1 // pred_fallthru
      _
    %v21 = vld [vmem:[#allocation2] sm:$0xf]
    %v22 = vlaneseq
    %vm23 = vcmp.ge.s32.totalorder %v22, 0
    %vm24 = vcmp.lt.s32.totalorder %v22, 512
    %vm25 = vmand %vm23, %vm24
    %26 = vst.msk [vmem:[#allocation5] sm:$0xf] %vm25, %v21
    // Predicated region
    $region10: #{tpu_custom_call.1} parent=1 // pred_check
      _
    $region11: #{tpu_custom_call.1} parent=1 // pred_check_branch
      %28 = sbr.rel (0) target = $region13
    $region12: #{tpu_custom_call.1} parent=1 // pred_region
      %s30 = ssub.s32 64, 64
      %31 = vsyncadd [#allocation4], %s30
      %s33 = sshll.u32 [#allocation5], 4
      %s34 = int_to_ptr.vmem [resolvable:$true] %s33
      %36 = dma.vmem_to_hbm [thread:$0]  %s34, 64, %s1, [#allocation4]
    $region13: #{tpu_custom_call.1} parent=1 // pred_fallthru
      _
    // Predicated region
    $region14: #{tpu_custom_call.1} parent=1 // pred_check
      _
    $region15: #{tpu_custom_call.1} parent=1 // pred_check_branch
      %38 = sbr.rel (0) target = $region17
    $region16: #{tpu_custom_call.1} parent=1 // pred_region
      %39 = dma.done [#allocation4], 64
    $region17: #{tpu_custom_call.1} parent=1 // pred_fallthru
      _
    %40 = vsyncpa [#allocation3], 1
    %41 = vsyncpa [#allocation4], 1

</llo_original>
